<compile_context>
chip_gen: v6e
topology: v6e:2x2x1
jax: 0.10.0
libtpu: 0.0.40
codegen_flags: <defaults>
</compile_context>

<pallas_src>
import math
from typing import NamedTuple, Optional

import jax
import jax.numpy as jnp
from jax.experimental import pallas as pl
from jax.experimental.pallas import tpu as pltpu

_INV_SQRT2 = 0.7071067811865476
_SQRT_2_OVER_PI = 0.7978845608028654


def _round_up(a, b):
    return (a + b - 1) // b * b


def _device_kind() -> str:
    try:
        return jax.devices()[0].device_kind.lower()
    except Exception:
        return ""


def _vmem_capacity_bytes() -> int:
    try:
        return int(pltpu.get_tpu_info().vmem_capacity_bytes)
    except Exception:
        return 64 << 20  # conservative (v7x-sized) default


class MLPParams(NamedTuple):
    """Padded, bf16-cast weights. Build ONCE with prepare_mlp_params()."""
    w1: jax.Array   # (Cp, Hp) bf16  -- c_fc.weight.T, zero-padded
    b1: jax.Array   # (1, Hp)  f32   -- c_fc.bias
    w2: jax.Array   # (Hp, Cp) bf16  -- c_proj.weight.T, zero-padded
    b2: jax.Array   # (1, Cp)  f32   -- c_proj.bias
    C: int
    H: int


def prepare_mlp_params(w1, b1, w2, b2) -> MLPParams:
    """One-time lane-dense (multiple-of-128) pad + bf16 cast of the weights."""
    C, H = w1.shape
    assert w2.shape == (H, C) and b1.shape == (H,) and b2.shape == (C,)
    Cp = _round_up(C, 128)
    Hp = _round_up(H, 128)
    w1p = jnp.pad(w1, ((0, Cp - C), (0, Hp - H))).astype(jnp.bfloat16)
    w2p = jnp.pad(w2, ((0, Hp - H), (0, Cp - C))).astype(jnp.bfloat16)
    b1p = jnp.pad(b1, (0, Hp - H)).astype(jnp.float32).reshape(1, Hp)
    b2p = jnp.pad(b2, (0, Cp - C)).astype(jnp.float32).reshape(1, Cp)
    return MLPParams(w1p, b1p, w2p, b2p, C, H)


def _gelu(h, use_tanh):
    if use_tanh:
        # GPT-2 'gelu_new' tanh approximation: one EUP tanh + a few VALU ops
        # instead of the ~20-op erf VALU polynomial (the v6e/v7x saturating
        # slot for C <= ~1024).  Within bf16-matmul tolerance of exact GELU.
        return 0.5 * h * (1.0 + jnp.tanh(_SQRT_2_OVER_PI * (h + 0.044715 * h * h * h)))
    # Exact erf GELU — matches torch.nn.GELU() default.
    return 0.5 * h * (1.0 + jax.lax.erf(h * _INV_SQRT2))


def _make_fused_kernel(use_tanh_gelu):
    """n_h == 1: both matmuls in one step; write o_ref directly (no scratch)."""
    def kernel(x_ref, w1_ref, b1_ref, w2_ref, b2_ref, o_ref):
        x = x_ref[...].astype(jnp.bfloat16)          # no-op if already bf16
        h = jnp.dot(x, w1_ref[...], preferred_element_type=jnp.float32)
        h = _gelu(h + b1_ref[...], use_tanh_gelu)
        o_ref[...] = (jnp.dot(h.astype(w2_ref.dtype), w2_ref[...],
                              preferred_element_type=jnp.float32)
                      + b2_ref[...]).astype(o_ref.dtype)
    return kernel


def _make_split_kernel(use_tanh_gelu):
    """n_h > 1: H-tiled reduction with an f32 accumulator scratch."""
    def kernel(x_ref, w1_ref, b1_ref, w2_ref, b2_ref, o_ref, acc_ref):
        h_idx = pl.program_id(1)

        @pl.when(h_idx == 0)
        def _():
            acc_ref[...] = jnp.zeros_like(acc_ref)

        x = x_ref[...].astype(jnp.bfloat16)
        h = jnp.dot(x, w1_ref[...], preferred_element_type=jnp.float32)
        h = _gelu(h + b1_ref[...], use_tanh_gelu)
        acc_ref[...] += jnp.dot(h.astype(w2_ref.dtype), w2_ref[...],
                                preferred_element_type=jnp.float32)

        @pl.when(h_idx == pl.num_programs(1) - 1)
        def _():
            o_ref[...] = (acc_ref[...] + b2_ref[...]).astype(o_ref.dtype)
    return kernel


def _choose_tm(M, preferred):
    """Largest tile <= preferred (multiple of 16) wasting <= 12.5% on padding."""
    cands = [c for c in (1024, 512, 256, 128, 64, 32, 16) if c <= max(preferred, 16)]
    for c in cands:
        if ((-M) % c) * 8 <= M:
            return c
    return cands[-1]


def _est_vmem_bytes(tm, th, Cp, x_bytes, weight_bufs, with_acc):
    act_in = 2 * tm * Cp * x_bytes            # x tile, double-buffered
    act_out = 2 * tm * Cp * 4                 # f32 out tile, double-buffered
    wts = weight_bufs * ((Cp * th + th * Cp) * 2 + 8 * (th + Cp) * 4)
    acc = tm * Cp * 4 if with_acc else 0
    hbuf = tm * th * 10                       # f32 h + bf16 copy + gelu temps
    return act_in + act_out + wts + acc + hbuf


def mlp_pallas(x, params: MLPParams, *, tm: Optional[int] = None,
               vmem_target_bytes: Optional[int] = None,
               use_tanh_gelu: Optional[bool] = None):
    """x: (B, T, C). Returns (B, T, C) in x.dtype (fused c_fc->GELU->c_proj)."""
    B, T, C = x.shape
    assert C == params.C
    Cp, Hp = params.w1.shape
    M = B * T

    kind = _device_kind()
    is_v7 = "v7" in kind
    if use_tanh_gelu is None:
        # v6e/v7x: erf's VALU polynomial saturates; move transcendental to EUP.
        # v5e / unknown: keep exact f32 erf (MXU-bound there; no bf16 VPU).
        use_tanh_gelu = ("v6" in kind) or is_v7
    vmem_cap = _vmem_capacity_bytes()
    if vmem_target_bytes is None:
        vmem_target_bytes = int(0.75 * vmem_cap)   # ~48 MiB v7x / ~96 MiB v5e,v6e

    x2d_f32 = x.reshape(M, C)

    def run(allow_single_buffer: bool):
        # --- M tile: minimize padding, multiple of 16 (bf16 sublane packing).
        tm_ = _choose_tm(M, tm or 256)

        # --- resident-weight path? (th == Hp; weights DMA'd once overall)
        wbufs = 1 if allow_single_buffer else 2
        if _est_vmem_bytes(tm_, Hp, Cp, 2, wbufs, with_acc=False) <= vmem_target_bytes:
            th = Hp
        else:
            # Split H: raise tm so the weight-refetch path stays compute-bound,
            # th a multiple of 256 and >= 512 when possible.
            tm_ = max(tm_, _choose_tm(M, max(tm or 512, 512)))
            cands = [d for d in range(Hp, 127, -128) if Hp % d == 0]
            pref = [d for d in cands if d % 256 == 0 and d >= 512]
            ordered = pref + [d for d in cands if d not in pref]
            th = ordered[-1]
            for d in ordered:
                if _est_vmem_bytes(tm_, d, Cp, 2, 2, with_acc=True) <= vmem_target_bytes:
                    th = d
                    break

        # --- v7x megacore: ensure the "parallel" M axis has >= 2 tiles.
        if is_v7 and _round_up(M, tm_) // tm_ == 1 and M >= 32:
            tm_ = _round_up(max(16, tm_ // 2), 16)

        Mp = _round_up(M, tm_)
        n_m, n_h = Mp // tm_, Hp // th

        # --- x: pass f32 straight through when already tile-aligned (cast to
        # bf16 inside the kernel); otherwise pad + cast once in the wrapper.
        if Mp == M and Cp == C:
            x2d = x2d_f32
        else:
            x2d = jnp.pad(x2d_f32, ((0, Mp - M), (0, Cp - C))).astype(jnp.bfloat16)
        x_bytes = x2d.dtype.itemsize

        est = _est_vmem_bytes(tm_, th, Cp, x_bytes,
                              1 if (n_h == 1 and allow_single_buffer) else 2,
                              with_acc=n_h > 1)
        vmem_limit = int(min(int(0.92 * vmem_cap), max(int(1.5 * est), 32 << 20)))

        weight_bytes = (Cp * Hp + Hp * Cp) * 2 + (Hp + Cp) * 4
        cost = pl.CostEstimate(
            flops=int(4 * Mp * Cp * Hp),
            transcendentals=int(Mp * Hp),
            bytes_accessed=int(Mp * Cp * (x_bytes + 4)
                               + weight_bytes * (n_m if n_h > 1 else 1)),
        )

        # Grid-invariant blocks get a single VMEM buffer (no point double-
        # buffering blocks whose index never changes).
        single = dict(pipeline_mode=pl.Buffered(1)) if allow_single_buffer else {}
        w_mode = single if n_h == 1 else {}

        if n_h == 1:
            grid = (n_m,)
            in_specs = [
                pl.BlockSpec((tm_, Cp), lambda i: (i, 0)),            # x rows
                pl.BlockSpec((Cp, Hp), lambda i: (0, 0), **w_mode),   # W1
                pl.BlockSpec((1, Hp), lambda i: (0, 0), **w_mode),    # b1
                pl.BlockSpec((Hp, Cp), lambda i: (0, 0), **w_mode),   # W2
                pl.BlockSpec((1, Cp), lambda i: (0, 0), **w_mode),    # b2
            ]
            out_specs = pl.BlockSpec((tm_, Cp), lambda i: (i, 0))
            scratch = []
            kernel = _make_fused_kernel(use_tanh_gelu)
            sems = ("parallel",)
        else:
            grid = (n_m, n_h)
            in_specs = [
                pl.BlockSpec((tm_, Cp), lambda i, h: (i, 0)),          # x rows
                pl.BlockSpec((Cp, th), lambda i, h: (0, h)),           # W1 tile
                pl.BlockSpec((1, th), lambda i, h: (0, h)),            # b1 tile
                pl.BlockSpec((th, Cp), lambda i, h: (h, 0)),           # W2 tile
                pl.BlockSpec((1, Cp), lambda i, h: (0, 0), **single),  # b2
            ]
            out_specs = pl.BlockSpec((tm_, Cp), lambda i, h: (i, 0))
            scratch = [pltpu.VMEM((tm_, Cp), jnp.float32)]
            kernel = _make_split_kernel(use_tanh_gelu)
            sems = ("parallel", "arbitrary")

        return pl.pallas_call(
            kernel,
            out_shape=jax.ShapeDtypeStruct((Mp, Cp), x.dtype),
            grid_spec=pltpu.PrefetchScalarGridSpec(
                num_scalar_prefetch=0,
                grid=grid,
                in_specs=in_specs,
                out_specs=out_specs,
                scratch_shapes=scratch,
            ),
            compiler_params=pltpu.CompilerParams(
                dimension_semantics=sems,
                vmem_limit_bytes=vmem_limit,
            ),
            cost_estimate=cost,
        )(x2d, params.w1, params.b1, params.w2, params.b2)

    try:
        out2d = run(allow_single_buffer=True)
    except Exception:
        # Fallback for jax versions that reject pipeline_mode=pl.Buffered(1):
        # rebuild with default double-buffering (retiling the H axis if the
        # doubled weight footprint no longer fits the budget).
        out2d = run(allow_single_buffer=False)

    return out2d[:M, :C].reshape(B, T, C)


def reference_mlp(x, w1, b1, w2, b2):
    h = x @ w1 + b1
    h = 0.5 * h * (1.0 + jax.lax.erf(h / jnp.sqrt(2.0)))   # exact nn.GELU()
    return h @ w2 + b2


if __name__ == "__main__":
    # Small GPT-2-style config: n_embd=32, hidden = 4*n_embd = 128
    B, T, C = 2, 8, 32
    H = 4 * C

    key = jax.random.PRNGKey(0)
    kx, k1, k2, k3, k4 = jax.random.split(key, 5)

    x = jax.random.normal(kx, (B, T, C), dtype=jnp.float32)

    # PyTorch Linear default init: U(-1/sqrt(fan_in), 1/sqrt(fan_in))
    bound1 = 1.0 / math.sqrt(C)
    bound2 = 1.0 / math.sqrt(H)
    w1 = jax.random.uniform(k1, (C, H), jnp.float32, -bound1, bound1)   # c_fc.weight.T
    b1 = jax.random.uniform(k2, (H,), jnp.float32, -bound1, bound1)     # c_fc.bias
    w2 = jax.random.uniform(k3, (H, C), jnp.float32, -bound2, bound2)   # c_proj.weight.T
    b2 = jax.random.uniform(k4, (C,), jnp.float32, -bound2, bound2)     # c_proj.bias

    params = prepare_mlp_params(w1, b1, w2, b2)   # one-time pad + bf16 cast

    out = mlp_pallas(x, params)
    out = jax.block_until_ready(out)

    ref = reference_mlp(x, w1, b1, w2, b2)
    assert out.shape == (B, T, C)
    # bf16 MXU inputs + (on v6e/v7x) tanh-approx GELU vs exact-erf f32 ref.
    assert jnp.allclose(out, ref, atol=2e-2, rtol=2e-2), "mismatch vs reference"

    print("KERNEL_OK")
</pallas_src>

<mosaic_0001>
module attributes {stable_mosaic.version = 11 : i64} {
  func.func @kernel(%arg0: i32, %arg1: memref<16x128xbf16, #tpu.memory_space<vmem>>, %arg2: memref<128x128xbf16, #tpu.memory_space<vmem>>, %arg3: memref<1x128xf32, #tpu.memory_space<vmem>>, %arg4: memref<128x128xbf16, #tpu.memory_space<vmem>>, %arg5: memref<1x128xf32, #tpu.memory_space<vmem>>, %arg6: memref<16x128xf32, #tpu.memory_space<vmem>>) attributes {dimension_semantics = [#tpu.dimension_semantics<parallel>], iteration_bounds = array<i64: 1>, scalar_prefetch = 0 : i64, scratch_operands = 0 : i64, tpu.core_type = #tpu.core_type<tc>, window_params = [{transform_indices = @transform_0, window_bounds = array<i64: 16, 128>}, {pipeline_mode = #tpu.pipeline_mode<synchronous>, transform_indices = @transform_1, window_bounds = array<i64: 128, 128>}, {pipeline_mode = #tpu.pipeline_mode<synchronous>, transform_indices = @transform_2, window_bounds = array<i64: 1, 128>}, {pipeline_mode = #tpu.pipeline_mode<synchronous>, transform_indices = @transform_3, window_bounds = array<i64: 128, 128>}, {pipeline_mode = #tpu.pipeline_mode<synchronous>, transform_indices = @transform_4, window_bounds = array<i64: 1, 128>}, {transform_indices = @transform_5, window_bounds = array<i64: 16, 128>}]} {
    %c0 = arith.constant 0 : index
    %c0_0 = arith.constant 0 : index
    %0 = vector.load %arg1[%c0, %c0_0] : memref<16x128xbf16, #tpu.memory_space<vmem>>, vector<16x128xbf16>
    %c0_1 = arith.constant 0 : index
    %c0_2 = arith.constant 0 : index
    %1 = vector.load %arg2[%c0_1, %c0_2] : memref<128x128xbf16, #tpu.memory_space<vmem>>, vector<128x128xbf16>
    %cst = arith.constant dense<0.000000e+00> : vector<16x128xf32>
    %2 = tpu.matmul %0, %1, %cst {dimension_numbers = #tpu.dot_dimension_numbers<[1], [0], [0], [1], [0, 0, 1, 1], [], []>} : vector<16x128xbf16>, vector<128x128xbf16>, vector<16x128xf32> -> vector<16x128xf32>
    %c0_3 = arith.constant 0 : index
    %c0_4 = arith.constant 0 : index
    %3 = vector.load %arg3[%c0_3, %c0_4] : memref<1x128xf32, #tpu.memory_space<vmem>>, vector<1x128xf32>
    %4 = vector.broadcast %3 : vector<1x128xf32> to vector<16x128xf32>
    %5 = arith.addf %2, %4 : vector<16x128xf32>
    %cst_5 = arith.constant 5.000000e-01 : f32
    %6 = vector.broadcast %cst_5 : f32 to vector<16x128xf32>
    %7 = arith.mulf %6, %5 : vector<16x128xf32>
    %cst_6 = arith.constant 0.707106769 : f32
    %8 = vector.broadcast %cst_6 : f32 to vector<16x128xf32>
    %9 = arith.mulf %5, %8 : vector<16x128xf32>
    %10 = math.erf %9 : vector<16x128xf32>
    %cst_7 = arith.constant 1.000000e+00 : f32
    %11 = vector.broadcast %cst_7 : f32 to vector<16x128xf32>
    %12 = arith.addf %11, %10 : vector<16x128xf32>
    %13 = arith.mulf %7, %12 : vector<16x128xf32>
    %14 = arith.truncf %13 : vector<16x128xf32> to vector<16x128xbf16>
    %c0_8 = arith.constant 0 : index
    %c0_9 = arith.constant 0 : index
    %15 = vector.load %arg4[%c0_8, %c0_9] : memref<128x128xbf16, #tpu.memory_space<vmem>>, vector<128x128xbf16>
    %cst_10 = arith.constant dense<0.000000e+00> : vector<16x128xf32>
    %16 = tpu.matmul %14, %15, %cst_10 {dimension_numbers = #tpu.dot_dimension_numbers<[1], [0], [0], [1], [0, 0, 1, 1], [], []>} : vector<16x128xbf16>, vector<128x128xbf16>, vector<16x128xf32> -> vector<16x128xf32>
    %c0_11 = arith.constant 0 : index
    %c0_12 = arith.constant 0 : index
    %17 = vector.load %arg5[%c0_11, %c0_12] : memref<1x128xf32, #tpu.memory_space<vmem>>, vector<1x128xf32>
    %18 = vector.broadcast %17 : vector<1x128xf32> to vector<16x128xf32>
    %19 = arith.addf %16, %18 : vector<16x128xf32>
    %c0_13 = arith.constant 0 : index
    %c0_14 = arith.constant 0 : index
    %20 = vector.load %arg6[%c0_13, %c0_14] : memref<16x128xf32, #tpu.memory_space<vmem>>, vector<16x128xf32>
    tpu.vector_store %arg6[%c0_13, %c0_14], %19 {strides = array<i32>} : memref<16x128xf32, #tpu.memory_space<vmem>>, vector<16x128xf32>,
    return
  }
  func.func @transform_0(%arg0: i32) -> (i32, i32) {
    %c0_i32 = arith.constant 0 : i32
    %c0_i32_0 = arith.constant 0 : i32
    return %arg0, %c0_i32 : i32, i32
  }
  func.func @transform_1(%arg0: i32) -> (i32, i32) {
    %c0_i32 = arith.constant 0 : i32
    %c0_i32_0 = arith.constant 0 : i32
    %c0_i32_1 = arith.constant 0 : i32
    return %c0_i32, %c0_i32_0 : i32, i32
  }
  func.func @transform_2(%arg0: i32) -> (i32, i32) {
    %c0_i32 = arith.constant 0 : i32
    %c0_i32_0 = arith.constant 0 : i32
    %c0_i32_1 = arith.constant 0 : i32
    return %c0_i32, %c0_i32_0 : i32, i32
  }
  func.func @transform_3(%arg0: i32) -> (i32, i32) {
    %c0_i32 = arith.constant 0 : i32
    %c0_i32_0 = arith.constant 0 : i32
    %c0_i32_1 = arith.constant 0 : i32
    return %c0_i32, %c0_i32_0 : i32, i32
  }
  func.func @transform_4(%arg0: i32) -> (i32, i32) {
    %c0_i32 = arith.constant 0 : i32
    %c0_i32_0 = arith.constant 0 : i32
    %c0_i32_1 = arith.constant 0 : i32
    return %c0_i32, %c0_i32_0 : i32, i32
  }
  func.func @transform_5(%arg0: i32) -> (i32, i32) {
    %c0_i32 = arith.constant 0 : i32
    %c0_i32_0 = arith.constant 0 : i32
    return %arg0, %c0_i32 : i32, i32
  }
}

module attributes {stable_mosaic.version = 11 : i64} {
  func.func @kernel(%arg0: i32, %arg1: memref<16x128xbf16, #tpu.memory_space<vmem>>, %arg2: memref<128x128xbf16, #tpu.memory_space<vmem>>, %arg3: memref<1x128xf32, #tpu.memory_space<vmem>>, %arg4: memref<128x128xbf16, #tpu.memory_space<vmem>>, %arg5: memref<1x128xf32, #tpu.memory_space<vmem>>, %arg6: memref<16x128xf32, #tpu.memory_space<vmem>>) attributes {dimension_semantics = [#tpu.dimension_semantics<parallel>], iteration_bounds = array<i64: 1>, scalar_prefetch = 0 : i64, scratch_operands = 0 : i64, tpu.core_type = #tpu.core_type<tc>, window_params = [{transform_indices = @transform_0, window_bounds = array<i64: 16, 128>}, {pipeline_mode = #tpu.pipeline_mode<synchronous>, transform_indices = @transform_1, window_bounds = array<i64: 128, 128>}, {pipeline_mode = #tpu.pipeline_mode<synchronous>, transform_indices = @transform_2, window_bounds = array<i64: 1, 128>}, {pipeline_mode = #tpu.pipeline_mode<synchronous>, transform_indices = @transform_3, window_bounds = array<i64: 128, 128>}, {pipeline_mode = #tpu.pipeline_mode<synchronous>, transform_indices = @transform_4, window_bounds = array<i64: 1, 128>}, {transform_indices = @transform_5, window_bounds = array<i64: 16, 128>}]} {
    %c0 = arith.constant 0 : index
    %c0_0 = arith.constant 0 : index
    %0 = vector.load %arg1[%c0, %c0_0] : memref<16x128xbf16, #tpu.memory_space<vmem>>, vector<16x128xbf16>
    %c0_1 = arith.constant 0 : index
    %c0_2 = arith.constant 0 : index
    %1 = vector.load %arg2[%c0_1, %c0_2] : memref<128x128xbf16, #tpu.memory_space<vmem>>, vector<128x128xbf16>
    %cst = arith.constant dense<0.000000e+00> : vector<16x128xf32>
    %2 = tpu.matmul %0, %1, %cst {dimension_numbers = #tpu.dot_dimension_numbers<[1], [0], [0], [1], [0, 0, 1, 1], [], []>} : vector<16x128xbf16>, vector<128x128xbf16>, vector<16x128xf32> -> vector<16x128xf32>
    %c0_3 = arith.constant 0 : index
    %c0_4 = arith.constant 0 : index
    %3 = vector.load %arg3[%c0_3, %c0_4] : memref<1x128xf32, #tpu.memory_space<vmem>>, vector<1x128xf32>
    %4 = vector.broadcast %3 : vector<1x128xf32> to vector<16x128xf32>
    %5 = arith.addf %2, %4 : vector<16x128xf32>
    %cst_5 = arith.constant 5.000000e-01 : f32
    %6 = vector.broadcast %cst_5 : f32 to vector<16x128xf32>
    %7 = arith.mulf %6, %5 : vector<16x128xf32>
    %cst_6 = arith.constant 0.707106769 : f32
    %8 = vector.broadcast %cst_6 : f32 to vector<16x128xf32>
    %9 = arith.mulf %5, %8 : vector<16x128xf32>
    %10 = math.erf %9 : vector<16x128xf32>
    %cst_7 = arith.constant 1.000000e+00 : f32
    %11 = vector.broadcast %cst_7 : f32 to vector<16x128xf32>
    %12 = arith.addf %11, %10 : vector<16x128xf32>
    %13 = arith.mulf %7, %12 : vector<16x128xf32>
    %14 = arith.truncf %13 : vector<16x128xf32> to vector<16x128xbf16>
    %c0_8 = arith.constant 0 : index
    %c0_9 = arith.constant 0 : index
    %15 = vector.load %arg4[%c0_8, %c0_9] : memref<128x128xbf16, #tpu.memory_space<vmem>>, vector<128x128xbf16>
    %cst_10 = arith.constant dense<0.000000e+00> : vector<16x128xf32>
    %16 = tpu.matmul %14, %15, %cst_10 {dimension_numbers = #tpu.dot_dimension_numbers<[1], [0], [0], [1], [0, 0, 1, 1], [], []>} : vector<16x128xbf16>, vector<128x128xbf16>, vector<16x128xf32> -> vector<16x128xf32>
    %c0_11 = arith.constant 0 : index
    %c0_12 = arith.constant 0 : index
    %17 = vector.load %arg5[%c0_11, %c0_12] : memref<1x128xf32, #tpu.memory_space<vmem>>, vector<1x128xf32>
    %18 = vector.broadcast %17 : vector<1x128xf32> to vector<16x128xf32>
    %19 = arith.addf %16, %18 : vector<16x128xf32>
    %c0_13 = arith.constant 0 : index
    %c0_14 = arith.constant 0 : index
    %20 = vector.load %arg6[%c0_13, %c0_14] : memref<16x128xf32, #tpu.memory_space<vmem>>, vector<16x128xf32>
    tpu.vector_store %arg6[%c0_13, %c0_14], %19 {strides = array<i32>} : memref<16x128xf32, #tpu.memory_space<vmem>>, vector<16x128xf32>,
    return
  }
  func.func @transform_0(%arg0: i32) -> (i32, i32) {
    %c0_i32 = arith.constant 0 : i32
    %c0_i32_0 = arith.constant 0 : i32
    return %arg0, %c0_i32 : i32, i32
  }
  func.func @transform_1(%arg0: i32) -> (i32, i32) {
    %c0_i32 = arith.constant 0 : i32
    %c0_i32_0 = arith.constant 0 : i32
    %c0_i32_1 = arith.constant 0 : i32
    return %c0_i32, %c0_i32_0 : i32, i32
  }
  func.func @transform_2(%arg0: i32) -> (i32, i32) {
    %c0_i32 = arith.constant 0 : i32
    %c0_i32_0 = arith.constant 0 : i32
    %c0_i32_1 = arith.constant 0 : i32
    return %c0_i32, %c0_i32_0 : i32, i32
  }
  func.func @transform_3(%arg0: i32) -> (i32, i32) {
    %c0_i32 = arith.constant 0 : i32
    %c0_i32_0 = arith.constant 0 : i32
    %c0_i32_1 = arith.constant 0 : i32
    return %c0_i32, %c0_i32_0 : i32, i32
  }
  func.func @transform_4(%arg0: i32) -> (i32, i32) {
    %c0_i32 = arith.constant 0 : i32
    %c0_i32_0 = arith.constant 0 : i32
    %c0_i32_1 = arith.constant 0 : i32
    return %c0_i32, %c0_i32_0 : i32, i32
  }
  func.func @transform_5(%arg0: i32) -> (i32, i32) {
    %c0_i32 = arith.constant 0 : i32
    %c0_i32_0 = arith.constant 0 : i32
    return %arg0, %c0_i32 : i32, i32
  }
}

</mosaic_0001>

<llo_original>
// kernel: tpu_custom_call.1
$region0: #{tpu_custom_call.1}
  #allocation0 [shape = 'u32[]', space=smem, size = 0x4, offset = 0x4, fixed_abs, tag = 'smem constant byte address 0x4 - core index']
  #allocation1 [shape = 'u32[144,128]{1,0:T(1,128)}', space=vmem, size = 0x12000, scoped, tag = 'internal scratch']
  %s0 = inlined_call_operand.hbm [shape: bf16[16,128], index: 0, kind: input, shape index: {}]
  %s1 = inlined_call_operand.hbm [shape: bf16[128,128], index: 1, kind: input, shape index: {}]
  %s2 = inlined_call_operand.vmem [shape: f32[1,128], index: 2, kind: input, shape index: {}]
  %s3 = inlined_call_operand.hbm [shape: bf16[128,128], index: 3, kind: input, shape index: {}]
  %s4 = inlined_call_operand.vmem [shape: f32[1,128], index: 4, kind: input, shape index: {}]
  %s5 = inlined_call_operand.hbm [shape: f32[16,128], index: 5, kind: output, shape index: {}]
  %s6 = sld [smem:[#allocation0]]
  $region42: #{tpu_custom_call.1} parent=0
    _
  %s8 = ssub.s32 1, %s6
  %s9 = scalar_select 0, %s8, %s6
  $region1: #{tpu_custom_call.1} parent=0
    #allocation2 [shape = 'u8[4096]{0}', space=vmem, size = 0x1000, scoped, tag = 'input window, operand 0, single buffered']
    #allocation3 [shape = 's32[1]{0}', space=sflag, size = 0x4, scoped, tag = 'scoped memory for tpu_custom_call.1']
    #allocation4 [shape = 's32[1]{0}', space=sflag, size = 0x4, scoped, tag = 'scoped memory for tpu_custom_call.1']
    #allocation5 [shape = 'u8[32768]{0}', space=vmem, size = 0x8000, scoped, tag = 'input window, operand 1, single buffered']
    #allocation6 [shape = 's32[1]{0}', space=sflag, size = 0x4, scoped, tag = 'scoped memory for tpu_custom_call.1']
    #allocation7 [shape = 'u8[32768]{0}', space=vmem, size = 0x8000, scoped, tag = 'input window, operand 3, single buffered']
    #allocation8 [shape = 'u8[8192]{0}', space=vmem, size = 0x2000, scoped, tag = 'output window, operand 0, single buffered']
    %10 = vsyncpa [#allocation3], 0
    %11 = vsyncpa [#allocation6], 0
    %12 = vsyncpa [#allocation4], 0
    // Predicated region
    $region2: #{tpu_custom_call.1} parent=1 // pred_check
      _
    $region3: #{tpu_custom_call.1} parent=1 // pred_check_branch
      %14 = sbr.rel (0) target = $region5
    $region4: #{tpu_custom_call.1} parent=1 // pred_region
      %s16 = ssub.s32 128, 128
      %17 = vsyncadd [#allocation3], %s16
      %s18 = sshll.u32 [#allocation2], 4
      %s19 = int_to_ptr.vmem [resolvable:$true] %s18
      %24 = dma.hbm_to_vmem [thread:$0]  %s0, 128, %s19, [#allocation3], 64, 64, 4
    $region5: #{tpu_custom_call.1} parent=1 // pred_fallthru
      _
    // Predicated region
    $region6: #{tpu_custom_call.1} parent=1 // pred_check
      _
    $region7: #{tpu_custom_call.1} parent=1 // pred_check_branch
      %26 = sbr.rel (0) target = $region9
    $region8: #{tpu_custom_call.1} parent=1 // pred_region
      %s28 = ssub.s32 1024, 1024
      %29 = vsyncadd [#allocation6], %s28
      %s30 = sshll.u32 [#allocation5], 4
      %s31 = int_to_ptr.vmem [resolvable:$true] %s30
      %36 = dma.hbm_to_vmem [thread:$0]  %s1, 1024, %s31, [#allocation6], 64, 64, 4
    $region9: #{tpu_custom_call.1} parent=1 // pred_fallthru
      _
    // Predicated region
    $region10: #{tpu_custom_call.1} parent=1 // pred_check
      _
    $region11: #{tpu_custom_call.1} parent=1 // pred_check_branch
      %38 = sbr.rel (0) target = $region13
    $region12: #{tpu_custom_call.1} parent=1 // pred_region
      _
    $region13: #{tpu_custom_call.1} parent=1 // pred_fallthru
      _
    // Predicated region
    $region14: #{tpu_custom_call.1} parent=1 // pred_check
      _
    $region15: #{tpu_custom_call.1} parent=1 // pred_check_branch
      %40 = sbr.rel (0) target = $region17
    $region16: #{tpu_custom_call.1} parent=1 // pred_region
      %s42 = ssub.s32 1024, 1024
      %43 = vsyncadd [#allocation6], %s42
      %s44 = sshll.u32 [#allocation7], 4
      %s45 = int_to_ptr.vmem [resolvable:$true] %s44
      %50 = dma.hbm_to_vmem [thread:$0]  %s3, 1024, %s45, [#allocation6], 64, 64, 4
    $region17: #{tpu_custom_call.1} parent=1 // pred_fallthru
      _
    // Predicated region
    $region18: #{tpu_custom_call.1} parent=1 // pred_check
      _
    $region19: #{tpu_custom_call.1} parent=1 // pred_check_branch
      %52 = sbr.rel (0) target = $region21
    $region20: #{tpu_custom_call.1} parent=1 // pred_region
      _
    $region21: #{tpu_custom_call.1} parent=1 // pred_fallthru
      _
    // Predicated region
    $region22: #{tpu_custom_call.1} parent=1 // pred_check
      _
    $region23: #{tpu_custom_call.1} parent=1 // pred_check_branch
      %54 = sbr.rel (0) target = $region25
    $region24: #{tpu_custom_call.1} parent=1 // pred_region
      %55 = dma.done [#allocation3], 128
    $region25: #{tpu_custom_call.1} parent=1 // pred_fallthru
      _
    // Predicated region
    $region26: #{tpu_custom_call.1} parent=1 // pred_check
      _
    $region27: #{tpu_custom_call.1} parent=1 // pred_check_branch
      %57 = sbr.rel (0) target = $region29
    $region28: #{tpu_custom_call.1} parent=1 // pred_region
      %58 = dma.done [#allocation6], 1024
    $region29: #{tpu_custom_call.1} parent=1 // pred_fallthru
      _
    // Predicated region
    $region30: #{tpu_custom_call.1} parent=1 // pred_check
      _
    $region31: #{tpu_custom_call.1} parent=1 // pred_check_branch
      %60 = sbr.rel (0) target = $region33
    $region32: #{tpu_custom_call.1} parent=1 // pred_region
      %61 = dma.done [#allocation6], 1024
    $region33: #{tpu_custom_call.1} parent=1 // pred_fallthru
      _
    %v63 = vld [vmem:[#allocation2] sm:$0xf]
    %v64 = vld [vmem:[#allocation2 + $0x4] sm:$0xf]
    %v65 = vld [vmem:[#allocation5] sm:$0xf]
    %v66 = vld [vmem:[#allocation5 + $0x4] sm:$0xf]
    %v67 = vld [vmem:[#allocation5 + $0x8] sm:$0xf]
    %v68 = vld [vmem:[#allocation5 + $0xc] sm:$0xf]
    %v69 = vld [vmem:[#allocation5 + $0x10] sm:$0xf]
    %v70 = vld [vmem:[#allocation5 + $0x14] sm:$0xf]
    %v71 = vld [vmem:[#allocation5 + $0x18] sm:$0xf]
    %v72 = vld [vmem:[#allocation5 + $0x1c] sm:$0xf]
    %v73 = vld [vmem:[#allocation5 + $0x20] sm:$0xf]
    %v74 = vld [vmem:[#allocation5 + $0x24] sm:$0xf]
    %v75 = vld [vmem:[#allocation5 + $0x28] sm:$0xf]
    %v76 = vld [vmem:[#allocation5 + $0x2c] sm:$0xf]
    %v77 = vld [vmem:[#allocation5 + $0x30] sm:$0xf]
    %v78 = vld [vmem:[#allocation5 + $0x34] sm:$0xf]
    %v79 = vld [vmem:[#allocation5 + $0x38] sm:$0xf]
    %v80 = vld [vmem:[#allocation5 + $0x3c] sm:$0xf]
    %v81 = vld [vmem:[%s2] sm:$0x1]
    %v83 = vlaneseq
    %v84 = vshrl.u32 %v83, 7
    %v85 = vsub.s32 0, %v84
    %v86 = vrot.slane %v81, %v85
    %v90 = vunpack.c.l.b16 %v63
    %v91 = vunpack.c.l.b16 %v64
    %v92 = vpack.c.b16 %v91, %v90
    %v110 = vunpack.c.l.b16 %v65
    %v111 = vunpack.c.l.b16 %v66
    %v112 = vunpack.c.l.b16 %v67
    %v113 = vunpack.c.l.b16 %v68
    %v114 = vunpack.c.l.b16 %v69
    %v115 = vunpack.c.l.b16 %v70
    %v116 = vunpack.c.l.b16 %v71
    %v117 = vunpack.c.l.b16 %v72
    %v118 = vunpack.c.l.b16 %v73
    %v119 = vunpack.c.l.b16 %v74
    %v120 = vunpack.c.l.b16 %v75
    %v121 = vunpack.c.l.b16 %v76
    %v122 = vunpack.c.l.b16 %v77
    %v123 = vunpack.c.l.b16 %v78
    %v124 = vunpack.c.l.b16 %v79
    %v125 = vunpack.c.l.b16 %v80
    %v126 = vpack.c.b16 %v111, %v110
    %v127 = vpack.c.b16 %v113, %v112
    %v128 = vpack.c.b16 %v115, %v114
    %v129 = vpack.c.b16 %v117, %v116
    %v130 = vpack.c.b16 %v119, %v118
    %v131 = vpack.c.b16 %v121, %v120
    %v132 = vpack.c.b16 %v123, %v122
    %v133 = vpack.c.b16 %v125, %v124
    %142 = vmatprep.subr.bf16.mxu0 0
    %143 = vmatpush1.bf16.msra.mxu0 %v133
    %144 = vmatprep.subr.bf16.mxu0 0
    %145 = vmatpush1.bf16.msra.mxu0 %v132
    %146 = vmatprep.subr.bf16.mxu0 0
    %147 = vmatpush1.bf16.msra.mxu0 %v131
    %148 = vmatprep.subr.bf16.mxu0 0
    %149 = vmatpush1.bf16.msra.mxu0 %v130
    %150 = vmatprep.subr.bf16.mxu0 0
    %151 = vmatpush1.bf16.msra.mxu0 %v129
    %152 = vmatprep.subr.bf16.mxu0 0
    %153 = vmatpush1.bf16.msra.mxu0 %v128
    %154 = vmatprep.subr.bf16.mxu0 0
    %155 = vmatpush1.bf16.msra.mxu0 %v127
    %156 = vmatprep.subr.bf16.mxu0 0
    %157 = vmatpush1.bf16.msra.mxu0 %v126
    %158 = vmatprep.subr.bf16.mxu0 0
    %159 = vmatpush2.bf16.msra.mxu0 0
    %160 = vmatprep.subr.bf16.mxu0 0
    %161 = vmatpush2.bf16.msra.mxu0 0
    %162 = vmatprep.subr.bf16.mxu0 0
    %163 = vmatpush2.bf16.msra.mxu0 0
    %164 = vmatprep.subr.bf16.mxu0 0
    %165 = vmatpush2.bf16.msra.mxu0 0
    %166 = vmatprep.subr.bf16.mxu0 0
    %167 = vmatpush2.bf16.msra.mxu0 0
    %168 = vmatprep.subr.bf16.mxu0 0
    %169 = vmatpush2.bf16.msra.mxu0 0
    %170 = vmatprep.subr.bf16.mxu0 0
    %171 = vmatpush2.bf16.msra.mxu0 0
    %172 = vmatprep.subr.bf16.mxu0 0
    %173 = vmatpush2.bf16.msra.mxu0 0
    %174 = vmatprep.mubr.bf16.mxu0 0
    %175 = vmatmul.mubr.bf16.gmra.mxu0 %v92
    %v176 = vpop.f32.mrf.mxu0
    %v177 = vadd.f32 %v86, %v176
    %v178 = vpop.f32.mrf.mxu0
    %v179 = vpop.f32.mrf.mxu0
    %v180 = vadd.f32 %v86, %v179
    %v181 = vpop.f32.mrf.mxu0
    %182 = vdwg.mxu0
    %v183 = vmul.f32 %v177, 0.5
    %v184 = vmul.f32 %v180, 0.5
    %v185 = vmul.f32 %v177, 0.70710677
    %v186 = vmul.f32 %v180, 0.70710677
    %v187 = verf.f32.pop %v185
    %v188 = verf.f32.pop %v186
    %v189 = vadd.f32 %v187, 1.0
    %v190 = vadd.f32 %v188, 1.0
    %v191 = vmul.f32 %v183, %v189
    %v192 = vmul.f32 %v184, %v190
    %v193 = vpack.c.bf16 %v192, %v191
    %v194 = vld [vmem:[#allocation7] sm:$0xf]
    %v195 = vld [vmem:[#allocation7 + $0x4] sm:$0xf]
    %v196 = vld [vmem:[#allocation7 + $0x8] sm:$0xf]
    %v197 = vld [vmem:[#allocation7 + $0xc] sm:$0xf]
    %v198 = vld [vmem:[#allocation7 + $0x10] sm:$0xf]
    %v199 = vld [vmem:[#allocation7 + $0x14] sm:$0xf]
    %v200 = vld [vmem:[#allocation7 + $0x18] sm:$0xf]
    %v201 = vld [vmem:[#allocation7 + $0x1c] sm:$0xf]
    %v202 = vld [vmem:[#allocation7 + $0x20] sm:$0xf]
    %v203 = vld [vmem:[#allocation7 + $0x24] sm:$0xf]
    %v204 = vld [vmem:[#allocation7 + $0x28] sm:$0xf]
    %v205 = vld [vmem:[#allocation7 + $0x2c] sm:$0xf]
    %v206 = vld [vmem:[#allocation7 + $0x30] sm:$0xf]
    %v207 = vld [vmem:[#allocation7 + $0x34] sm:$0xf]
    %v208 = vld [vmem:[#allocation7 + $0x38] sm:$0xf]
    %v209 = vld [vmem:[#allocation7 + $0x3c] sm:$0xf]
    %v210 = vld [vmem:[%s4] sm:$0x1]
    %v212 = vlaneseq
    %v213 = vshrl.u32 %v212, 7
    %v214 = vsub.s32 0, %v213
    %v215 = vrot.slane %v210, %v214
    %v233 = vunpack.c.l.b16 %v194
    %v234 = vunpack.c.l.b16 %v195
    %v235 = vunpack.c.l.b16 %v196
    %v236 = vunpack.c.l.b16 %v197
    %v237 = vunpack.c.l.b16 %v198
    %v238 = vunpack.c.l.b16 %v199
    %v239 = vunpack.c.l.b16 %v200
    %v240 = vunpack.c.l.b16 %v201
    %v241 = vunpack.c.l.b16 %v202
    %v242 = vunpack.c.l.b16 %v203
    %v243 = vunpack.c.l.b16 %v204
    %v244 = vunpack.c.l.b16 %v205
    %v245 = vunpack.c.l.b16 %v206
    %v246 = vunpack.c.l.b16 %v207
    %v247 = vunpack.c.l.b16 %v208
    %v248 = vunpack.c.l.b16 %v209
    %v249 = vpack.c.b16 %v234, %v233
    %v250 = vpack.c.b16 %v236, %v235
    %v251 = vpack.c.b16 %v238, %v237
    %v252 = vpack.c.b16 %v240, %v239
    %v253 = vpack.c.b16 %v242, %v241
    %v254 = vpack.c.b16 %v244, %v243
    %v255 = vpack.c.b16 %v246, %v245
    %v256 = vpack.c.b16 %v248, %v247
    %265 = vmatprep.subr.bf16.mxu0 0
    %266 = vmatpush1.bf16.msra.mxu0 %v256
    %267 = vmatprep.subr.bf16.mxu0 0
    %268 = vmatpush1.bf16.msra.mxu0 %v255
    %269 = vmatprep.subr.bf16.mxu0 0
    %270 = vmatpush1.bf16.msra.mxu0 %v254
    %271 = vmatprep.subr.bf16.mxu0 0
    %272 = vmatpush1.bf16.msra.mxu0 %v253
    %273 = vmatprep.subr.bf16.mxu0 0
    %274 = vmatpush1.bf16.msra.mxu0 %v252
    %275 = vmatprep.subr.bf16.mxu0 0
    %276 = vmatpush1.bf16.msra.mxu0 %v251
    %277 = vmatprep.subr.bf16.mxu0 0
    %278 = vmatpush1.bf16.msra.mxu0 %v250
    %279 = vmatprep.subr.bf16.mxu0 0
    %280 = vmatpush1.bf16.msra.mxu0 %v249
    %281 = vmatprep.subr.bf16.mxu0 0
    %282 = vmatpush2.bf16.msra.mxu0 0
    %283 = vmatprep.subr.bf16.mxu0 0
    %284 = vmatpush2.bf16.msra.mxu0 0
    %285 = vmatprep.subr.bf16.mxu0 0
    %286 = vmatpush2.bf16.msra.mxu0 0
    %287 = vmatprep.subr.bf16.mxu0 0
    %288 = vmatpush2.bf16.msra.mxu0 0
    %289 = vmatprep.subr.bf16.mxu0 0
    %290 = vmatpush2.bf16.msra.mxu0 0
    %291 = vmatprep.subr.bf16.mxu0 0
    %292 = vmatpush2.bf16.msra.mxu0 0
    %293 = vmatprep.subr.bf16.mxu0 0
    %294 = vmatpush2.bf16.msra.mxu0 0
    %295 = vmatprep.subr.bf16.mxu0 0
    %296 = vmatpush2.bf16.msra.mxu0 0
    %297 = vmatprep.mubr.bf16.mxu0 0
    %298 = vmatmul.mubr.bf16.gmra.mxu0 %v193
    %v299 = vpop.f32.mrf.mxu0
    %v300 = vadd.f32 %v215, %v299
    %v301 = vpop.f32.mrf.mxu0
    %v302 = vpop.f32.mrf.mxu0
    %v303 = vadd.f32 %v215, %v302
    %v304 = vpop.f32.mrf.mxu0
    %305 = vdwg.mxu0
    %306 = vst [vmem:[#allocation8] sm:$0xff] %v300
    %307 = vst [vmem:[#allocation8 + $0x8] sm:$0xff] %v303
    // Predicated region
    $region34: #{tpu_custom_call.1} parent=1 // pred_check
      _
    $region35: #{tpu_custom_call.1} parent=1 // pred_check_branch
      %309 = sbr.rel (0) target = $region37
    $region36: #{tpu_custom_call.1} parent=1 // pred_region
      %s311 = ssub.s32 256, 256
      %312 = vsyncadd [#allocation4], %s311
      %s313 = sshll.u32 [#allocation8], 4
      %s314 = int_to_ptr.vmem [resolvable:$true] %s313
      %319 = dma.vmem_to_hbm [thread:$0]  %s314, 256, %s5, [#allocation4], 128, 128, 8
    $region37: #{tpu_custom_call.1} parent=1 // pred_fallthru
      _
    // Predicated region
    $region38: #{tpu_custom_call.1} parent=1 // pred_check
      _
    $region39: #{tpu_custom_call.1} parent=1 // pred_check_branch
      %321 = sbr.rel (0) target = $region41
    $region40: #{tpu_custom_call.1} parent=1 // pred_region
      %322 = dma.done [#allocation4], 256
    $region41: #{tpu_custom_call.1} parent=1 // pred_fallthru
      _
    %323 = vsyncpa [#allocation3], 1
    %324 = vsyncpa [#allocation6], 1
    %325 = vsyncpa [#allocation4], 1

// kernel: tpu_custom_call.1
$region0: #{tpu_custom_call.1}
  #allocation0 [shape = 'u32[]', space=smem, size = 0x4, offset = 0x4, fixed_abs, tag = 'smem constant byte address 0x4 - core index']
  #allocation1 [shape = 'u32[144,128]{1,0:T(1,128)}', space=vmem, size = 0x12000, scoped, tag = 'internal scratch']
  %s0 = inlined_call_operand.hbm [shape: bf16[16,128], index: 0, kind: input, shape index: {}]
  %s1 = inlined_call_operand.hbm [shape: bf16[128,128], index: 1, kind: input, shape index: {}]
  %s2 = inlined_call_operand.vmem [shape: f32[1,128], index: 2, kind: input, shape index: {}]
  %s3 = inlined_call_operand.hbm [shape: bf16[128,128], index: 3, kind: input, shape index: {}]
  %s4 = inlined_call_operand.vmem [shape: f32[1,128], index: 4, kind: input, shape index: {}]
  %s5 = inlined_call_operand.hbm [shape: f32[16,128], index: 5, kind: output, shape index: {}]
  %s6 = sld [smem:[#allocation0]]
  $region42: #{tpu_custom_call.1} parent=0
    _
  %s8 = ssub.s32 1, %s6
  %s9 = scalar_select 0, %s8, %s6
  $region1: #{tpu_custom_call.1} parent=0
    #allocation2 [shape = 'u8[4096]{0}', space=vmem, size = 0x1000, scoped, tag = 'input window, operand 0, single buffered']
    #allocation3 [shape = 's32[1]{0}', space=sflag, size = 0x4, scoped, tag = 'scoped memory for tpu_custom_call.1']
    #allocation4 [shape = 's32[1]{0}', space=sflag, size = 0x4, scoped, tag = 'scoped memory for tpu_custom_call.1']
    #allocation5 [shape = 'u8[32768]{0}', space=vmem, size = 0x8000, scoped, tag = 'input window, operand 1, single buffered']
    #allocation6 [shape = 's32[1]{0}', space=sflag, size = 0x4, scoped, tag = 'scoped memory for tpu_custom_call.1']
    #allocation7 [shape = 'u8[32768]{0}', space=vmem, size = 0x8000, scoped, tag = 'input window, operand 3, single buffered']
    #allocation8 [shape = 'u8[8192]{0}', space=vmem, size = 0x2000, scoped, tag = 'output window, operand 0, single buffered']
    %10 = vsyncpa [#allocation3], 0
    %11 = vsyncpa [#allocation6], 0
    %12 = vsyncpa [#allocation4], 0
    // Predicated region
    $region2: #{tpu_custom_call.1} parent=1 // pred_check
      _
    $region3: #{tpu_custom_call.1} parent=1 // pred_check_branch
      %14 = sbr.rel (0) target = $region5
    $region4: #{tpu_custom_call.1} parent=1 // pred_region
      %s16 = ssub.s32 128, 128
      %17 = vsyncadd [#allocation3], %s16
      %s18 = sshll.u32 [#allocation2], 4
      %s19 = int_to_ptr.vmem [resolvable:$true] %s18
      %24 = dma.hbm_to_vmem [thread:$0]  %s0, 128, %s19, [#allocation3], 64, 64, 4
    $region5: #{tpu_custom_call.1} parent=1 // pred_fallthru
      _
    // Predicated region
    $region6: #{tpu_custom_call.1} parent=1 // pred_check
      _
    $region7: #{tpu_custom_call.1} parent=1 // pred_check_branch
      %26 = sbr.rel (0) target = $region9
    $region8: #{tpu_custom_call.1} parent=1 // pred_region
      %s28 = ssub.s32 1024, 1024
      %29 = vsyncadd [#allocation6], %s28
      %s30 = sshll.u32 [#allocation5], 4
      %s31 = int_to_ptr.vmem [resolvable:$true] %s30
      %36 = dma.hbm_to_vmem [thread:$0]  %s1, 1024, %s31, [#allocation6], 64, 64, 4
    $region9: #{tpu_custom_call.1} parent=1 // pred_fallthru
      _
    // Predicated region
    $region10: #{tpu_custom_call.1} parent=1 // pred_check
      _
    $region11: #{tpu_custom_call.1} parent=1 // pred_check_branch
      %38 = sbr.rel (0) target = $region13
    $region12: #{tpu_custom_call.1} parent=1 // pred_region
      _
    $region13: #{tpu_custom_call.1} parent=1 // pred_fallthru
      _
    // Predicated region
    $region14: #{tpu_custom_call.1} parent=1 // pred_check
      _
    $region15: #{tpu_custom_call.1} parent=1 // pred_check_branch
      %40 = sbr.rel (0) target = $region17
    $region16: #{tpu_custom_call.1} parent=1 // pred_region
      %s42 = ssub.s32 1024, 1024
      %43 = vsyncadd [#allocation6], %s42
      %s44 = sshll.u32 [#allocation7], 4
      %s45 = int_to_ptr.vmem [resolvable:$true] %s44
      %50 = dma.hbm_to_vmem [thread:$0]  %s3, 1024, %s45, [#allocation6], 64, 64, 4
    $region17: #{tpu_custom_call.1} parent=1 // pred_fallthru
      _
    // Predicated region
    $region18: #{tpu_custom_call.1} parent=1 // pred_check
      _
    $region19: #{tpu_custom_call.1} parent=1 // pred_check_branch
      %52 = sbr.rel (0) target = $region21
    $region20: #{tpu_custom_call.1} parent=1 // pred_region
      _
    $region21: #{tpu_custom_call.1} parent=1 // pred_fallthru
      _
    // Predicated region
    $region22: #{tpu_custom_call.1} parent=1 // pred_check
      _
    $region23: #{tpu_custom_call.1} parent=1 // pred_check_branch
      %54 = sbr.rel (0) target = $region25
    $region24: #{tpu_custom_call.1} parent=1 // pred_region
      %55 = dma.done [#allocation3], 128
    $region25: #{tpu_custom_call.1} parent=1 // pred_fallthru
      _
    // Predicated region
    $region26: #{tpu_custom_call.1} parent=1 // pred_check
      _
    $region27: #{tpu_custom_call.1} parent=1 // pred_check_branch
      %57 = sbr.rel (0) target = $region29
    $region28: #{tpu_custom_call.1} parent=1 // pred_region
      %58 = dma.done [#allocation6], 1024
    $region29: #{tpu_custom_call.1} parent=1 // pred_fallthru
      _
    // Predicated region
    $region30: #{tpu_custom_call.1} parent=1 // pred_check
      _
    $region31: #{tpu_custom_call.1} parent=1 // pred_check_branch
      %60 = sbr.rel (0) target = $region33
    $region32: #{tpu_custom_call.1} parent=1 // pred_region
      %61 = dma.done [#allocation6], 1024
    $region33: #{tpu_custom_call.1} parent=1 // pred_fallthru
      _
    %v63 = vld [vmem:[#allocation2] sm:$0xf]
    %v64 = vld [vmem:[#allocation2 + $0x4] sm:$0xf]
    %v65 = vld [vmem:[#allocation5] sm:$0xf]
    %v66 = vld [vmem:[#allocation5 + $0x4] sm:$0xf]
    %v67 = vld [vmem:[#allocation5 + $0x8] sm:$0xf]
    %v68 = vld [vmem:[#allocation5 + $0xc] sm:$0xf]
    %v69 = vld [vmem:[#allocation5 + $0x10] sm:$0xf]
    %v70 = vld [vmem:[#allocation5 + $0x14] sm:$0xf]
    %v71 = vld [vmem:[#allocation5 + $0x18] sm:$0xf]
    %v72 = vld [vmem:[#allocation5 + $0x1c] sm:$0xf]
    %v73 = vld [vmem:[#allocation5 + $0x20] sm:$0xf]
    %v74 = vld [vmem:[#allocation5 + $0x24] sm:$0xf]
    %v75 = vld [vmem:[#allocation5 + $0x28] sm:$0xf]
    %v76 = vld [vmem:[#allocation5 + $0x2c] sm:$0xf]
    %v77 = vld [vmem:[#allocation5 + $0x30] sm:$0xf]
    %v78 = vld [vmem:[#allocation5 + $0x34] sm:$0xf]
    %v79 = vld [vmem:[#allocation5 + $0x38] sm:$0xf]
    %v80 = vld [vmem:[#allocation5 + $0x3c] sm:$0xf]
    %v81 = vld [vmem:[%s2] sm:$0x1]
    %v83 = vlaneseq
    %v84 = vshrl.u32 %v83, 7
    %v85 = vsub.s32 0, %v84
    %v86 = vrot.slane %v81, %v85
    %v90 = vunpack.c.l.b16 %v63
    %v91 = vunpack.c.l.b16 %v64
    %v92 = vpack.c.b16 %v91, %v90
    %v110 = vunpack.c.l.b16 %v65
    %v111 = vunpack.c.l.b16 %v66
    %v112 = vunpack.c.l.b16 %v67
    %v113 = vunpack.c.l.b16 %v68
    %v114 = vunpack.c.l.b16 %v69
    %v115 = vunpack.c.l.b16 %v70
    %v116 = vunpack.c.l.b16 %v71
    %v117 = vunpack.c.l.b16 %v72
    %v118 = vunpack.c.l.b16 %v73
    %v119 = vunpack.c.l.b16 %v74
    %v120 = vunpack.c.l.b16 %v75
    %v121 = vunpack.c.l.b16 %v76
    %v122 = vunpack.c.l.b16 %v77
    %v123 = vunpack.c.l.b16 %v78
    %v124 = vunpack.c.l.b16 %v79
    %v125 = vunpack.c.l.b16 %v80
    %v126 = vpack.c.b16 %v111, %v110
    %v127 = vpack.c.b16 %v113, %v112
    %v128 = vpack.c.b16 %v115, %v114
    %v129 = vpack.c.b16 %v117, %v116
    %v130 = vpack.c.b16 %v119, %v118
    %v131 = vpack.c.b16 %v121, %v120
    %v132 = vpack.c.b16 %v123, %v122
    %v133 = vpack.c.b16 %v125, %v124
    %142 = vmatprep.subr.bf16.mxu0 0
    %143 = vmatpush1.bf16.msra.mxu0 %v133
    %144 = vmatprep.subr.bf16.mxu0 0
    %145 = vmatpush1.bf16.msra.mxu0 %v132
    %146 = vmatprep.subr.bf16.mxu0 0
    %147 = vmatpush1.bf16.msra.mxu0 %v131
    %148 = vmatprep.subr.bf16.mxu0 0
    %149 = vmatpush1.bf16.msra.mxu0 %v130
    %150 = vmatprep.subr.bf16.mxu0 0
    %151 = vmatpush1.bf16.msra.mxu0 %v129
    %152 = vmatprep.subr.bf16.mxu0 0
    %153 = vmatpush1.bf16.msra.mxu0 %v128
    %154 = vmatprep.subr.bf16.mxu0 0
    %155 = vmatpush1.bf16.msra.mxu0 %v127
    %156 = vmatprep.subr.bf16.mxu0 0
    %157 = vmatpush1.bf16.msra.mxu0 %v126
    %158 = vmatprep.subr.bf16.mxu0 0
    %159 = vmatpush2.bf16.msra.mxu0 0
    %160 = vmatprep.subr.bf16.mxu0 0
    %161 = vmatpush2.bf16.msra.mxu0 0
    %162 = vmatprep.subr.bf16.mxu0 0
    %163 = vmatpush2.bf16.msra.mxu0 0
    %164 = vmatprep.subr.bf16.mxu0 0
    %165 = vmatpush2.bf16.msra.mxu0 0
    %166 = vmatprep.subr.bf16.mxu0 0
    %167 = vmatpush2.bf16.msra.mxu0 0
    %168 = vmatprep.subr.bf16.mxu0 0
    %169 = vmatpush2.bf16.msra.mxu0 0
    %170 = vmatprep.subr.bf16.mxu0 0
    %171 = vmatpush2.bf16.msra.mxu0 0
    %172 = vmatprep.subr.bf16.mxu0 0
    %173 = vmatpush2.bf16.msra.mxu0 0
    %174 = vmatprep.mubr.bf16.mxu0 0
    %175 = vmatmul.mubr.bf16.gmra.mxu0 %v92
    %v176 = vpop.f32.mrf.mxu0
    %v177 = vadd.f32 %v86, %v176
    %v178 = vpop.f32.mrf.mxu0
    %v179 = vpop.f32.mrf.mxu0
    %v180 = vadd.f32 %v86, %v179
    %v181 = vpop.f32.mrf.mxu0
    %182 = vdwg.mxu0
    %v183 = vmul.f32 %v177, 0.5
    %v184 = vmul.f32 %v180, 0.5
    %v185 = vmul.f32 %v177, 0.70710677
    %v186 = vmul.f32 %v180, 0.70710677
    %v187 = verf.f32.pop %v185
    %v188 = verf.f32.pop %v186
    %v189 = vadd.f32 %v187, 1.0
    %v190 = vadd.f32 %v188, 1.0
    %v191 = vmul.f32 %v183, %v189
    %v192 = vmul.f32 %v184, %v190
    %v193 = vpack.c.bf16 %v192, %v191
    %v194 = vld [vmem:[#allocation7] sm:$0xf]
    %v195 = vld [vmem:[#allocation7 + $0x4] sm:$0xf]
    %v196 = vld [vmem:[#allocation7 + $0x8] sm:$0xf]
    %v197 = vld [vmem:[#allocation7 + $0xc] sm:$0xf]
    %v198 = vld [vmem:[#allocation7 + $0x10] sm:$0xf]
    %v199 = vld [vmem:[#allocation7 + $0x14] sm:$0xf]
    %v200 = vld [vmem:[#allocation7 + $0x18] sm:$0xf]
    %v201 = vld [vmem:[#allocation7 + $0x1c] sm:$0xf]
    %v202 = vld [vmem:[#allocation7 + $0x20] sm:$0xf]
    %v203 = vld [vmem:[#allocation7 + $0x24] sm:$0xf]
    %v204 = vld [vmem:[#allocation7 + $0x28] sm:$0xf]
    %v205 = vld [vmem:[#allocation7 + $0x2c] sm:$0xf]
    %v206 = vld [vmem:[#allocation7 + $0x30] sm:$0xf]
    %v207 = vld [vmem:[#allocation7 + $0x34] sm:$0xf]
    %v208 = vld [vmem:[#allocation7 + $0x38] sm:$0xf]
    %v209 = vld [vmem:[#allocation7 + $0x3c] sm:$0xf]
    %v210 = vld [vmem:[%s4] sm:$0x1]
    %v212 = vlaneseq
    %v213 = vshrl.u32 %v212, 7
    %v214 = vsub.s32 0, %v213
    %v215 = vrot.slane %v210, %v214
    %v233 = vunpack.c.l.b16 %v194
    %v234 = vunpack.c.l.b16 %v195
    %v235 = vunpack.c.l.b16 %v196
    %v236 = vunpack.c.l.b16 %v197
    %v237 = vunpack.c.l.b16 %v198
    %v238 = vunpack.c.l.b16 %v199
    %v239 = vunpack.c.l.b16 %v200
    %v240 = vunpack.c.l.b16 %v201
    %v241 = vunpack.c.l.b16 %v202
    %v242 = vunpack.c.l.b16 %v203
    %v243 = vunpack.c.l.b16 %v204
    %v244 = vunpack.c.l.b16 %v205
    %v245 = vunpack.c.l.b16 %v206
    %v246 = vunpack.c.l.b16 %v207
    %v247 = vunpack.c.l.b16 %v208
    %v248 = vunpack.c.l.b16 %v209
    %v249 = vpack.c.b16 %v234, %v233
    %v250 = vpack.c.b16 %v236, %v235
    %v251 = vpack.c.b16 %v238, %v237
    %v252 = vpack.c.b16 %v240, %v239
    %v253 = vpack.c.b16 %v242, %v241
    %v254 = vpack.c.b16 %v244, %v243
    %v255 = vpack.c.b16 %v246, %v245
    %v256 = vpack.c.b16 %v248, %v247
    %265 = vmatprep.subr.bf16.mxu0 0
    %266 = vmatpush1.bf16.msra.mxu0 %v256
    %267 = vmatprep.subr.bf16.mxu0 0
    %268 = vmatpush1.bf16.msra.mxu0 %v255
    %269 = vmatprep.subr.bf16.mxu0 0
    %270 = vmatpush1.bf16.msra.mxu0 %v254
    %271 = vmatprep.subr.bf16.mxu0 0
    %272 = vmatpush1.bf16.msra.mxu0 %v253
    %273 = vmatprep.subr.bf16.mxu0 0
    %274 = vmatpush1.bf16.msra.mxu0 %v252
    %275 = vmatprep.subr.bf16.mxu0 0
    %276 = vmatpush1.bf16.msra.mxu0 %v251
    %277 = vmatprep.subr.bf16.mxu0 0
    %278 = vmatpush1.bf16.msra.mxu0 %v250
    %279 = vmatprep.subr.bf16.mxu0 0
    %280 = vmatpush1.bf16.msra.mxu0 %v249
    %281 = vmatprep.subr.bf16.mxu0 0
    %282 = vmatpush2.bf16.msra.mxu0 0
    %283 = vmatprep.subr.bf16.mxu0 0
    %284 = vmatpush2.bf16.msra.mxu0 0
    %285 = vmatprep.subr.bf16.mxu0 0
    %286 = vmatpush2.bf16.msra.mxu0 0
    %287 = vmatprep.subr.bf16.mxu0 0
    %288 = vmatpush2.bf16.msra.mxu0 0
    %289 = vmatprep.subr.bf16.mxu0 0
    %290 = vmatpush2.bf16.msra.mxu0 0
    %291 = vmatprep.subr.bf16.mxu0 0
    %292 = vmatpush2.bf16.msra.mxu0 0
    %293 = vmatprep.subr.bf16.mxu0 0
    %294 = vmatpush2.bf16.msra.mxu0 0
    %295 = vmatprep.subr.bf16.mxu0 0
    %296 = vmatpush2.bf16.msra.mxu0 0
    %297 = vmatprep.mubr.bf16.mxu0 0
    %298 = vmatmul.mubr.bf16.gmra.mxu0 %v193
    %v299 = vpop.f32.mrf.mxu0
    %v300 = vadd.f32 %v215, %v299
    %v301 = vpop.f32.mrf.mxu0
    %v302 = vpop.f32.mrf.mxu0
    %v303 = vadd.f32 %v215, %v302
    %v304 = vpop.f32.mrf.mxu0
    %305 = vdwg.mxu0
    %306 = vst [vmem:[#allocation8] sm:$0xff] %v300
    %307 = vst [vmem:[#allocation8 + $0x8] sm:$0xff] %v303
    // Predicated region
    $region34: #{tpu_custom_call.1} parent=1 // pred_check
      _
    $region35: #{tpu_custom_call.1} parent=1 // pred_check_branch
      %309 = sbr.rel (0) target = $region37
    $region36: #{tpu_custom_call.1} parent=1 // pred_region
      %s311 = ssub.s32 256, 256
      %312 = vsyncadd [#allocation4], %s311
      %s313 = sshll.u32 [#allocation8], 4
      %s314 = int_to_ptr.vmem [resolvable:$true] %s313
      %319 = dma.vmem_to_hbm [thread:$0]  %s314, 256, %s5, [#allocation4], 128, 128, 8
    $region37: #{tpu_custom_call.1} parent=1 // pred_fallthru
      _
    // Predicated region
    $region38: #{tpu_custom_call.1} parent=1 // pred_check
      _
    $region39: #{tpu_custom_call.1} parent=1 // pred_check_branch
      %321 = sbr.rel (0) target = $region41
    $region40: #{tpu_custom_call.1} parent=1 // pred_region
      %322 = dma.done [#allocation4], 256
    $region41: #{tpu_custom_call.1} parent=1 // pred_fallthru
      _
    %323 = vsyncpa [#allocation3], 1
    %324 = vsyncpa [#allocation6], 1
    %325 = vsyncpa [#allocation4], 1

</llo_original>
